<compile_context>
chip_gen: v7x
topology: tpu7x:2x2x1
jax: 0.10.0
libtpu: 0.0.40
codegen_flags: <defaults>
</compile_context>

<pallas_src>
import jax
import jax.numpy as jnp
from jax import lax
from jax.experimental import pallas as pl
from jax.experimental.pallas import tpu as pltpu


def _make_mlp_kernel(d_in: int, hidden: int):
    """Build the kernel with static D_in / H closed over (for static slices)."""

    def kernel(x_ref, p_ref, o_ref):
        # Static views into the packed parameter buffer (one VMEM-resident tile).
        w1 = p_ref[0:hidden, 0:d_in]                 # (H, D_in)
        b1 = p_ref[hidden:hidden + 1, 0:hidden]      # (1, H) row bias
        w2 = p_ref[hidden + 1:hidden + 2, 0:hidden]  # (1, H) row weights
        b2 = p_ref[hidden + 2:hidden + 3, 0:1]       # (1, 1) scalar bias

        # fc1 on the MXU: contract D_in of x (TB, D_in) with D_in of w1 (H, D_in)
        # -> (TB, H). Keeping the batch on sublanes keeps everything downstream
        # in a single near-dense vreg at small TB.
        h = lax.dot_general(
            x_ref[...], w1,
            dimension_numbers=(((1,), (1,)), ((), ())),
            preferred_element_type=jnp.float32,
        )                                            # (TB, H) f32
        h = jnp.maximum(h + b1, 0.0)                 # sublane-broadcast bias + ReLU

        # fc2 (single output feature): VPU multiply + XLU cross-lane reduce.
        out = jnp.sum(h * w2, axis=-1, keepdims=True)    # (TB, 1)
        out = jnp.maximum(out + b2, 0.0)                 # + b2, final ReLU
        o_ref[...] = out.astype(o_ref.dtype)

    return kernel


def pack_params(w1, b1, w2, b2):
    """Pack fc1/fc2 parameters into one contiguous (H+3, max(D_in,H)) buffer.

    Layout:
      rows [0, H)   cols [0, D_in) : w1
      row  H        cols [0, H)    : b1
      row  H + 1    cols [0, H)    : w2 (flattened)
      row  H + 2    col  0         : b2
    Done once at init; cuts per-call input DMAs from 5 to 2.
    """
    hidden, d_in = w1.shape
    width = max(d_in, hidden)
    p = jnp.zeros((hidden + 3, width), jnp.float32)
    p = p.at[:hidden, :d_in].set(w1.astype(jnp.float32))
    p = p.at[hidden, :hidden].set(b1.astype(jnp.float32))
    p = p.at[hidden + 1, :hidden].set(w2.reshape(-1).astype(jnp.float32))
    p = p.at[hidden + 2, 0].set(jnp.reshape(b2, ()).astype(jnp.float32))
    return p


def net_forward(x, params, *, block_b: int | None = None):
    """x: (B, D_in); params: packed buffer from pack_params. Returns (B, 1)."""
    B, d_in = x.shape
    hidden = params.shape[0] - 3
    width = params.shape[1]

    # Batch tile: full batch for small B, 256-row tiles (grid-pipelined,
    # "parallel" so v7x shards steps across its two TensorCores) for large B.
    if block_b is None:
        block_b = B if B <= 256 else 256
    grid = (pl.cdiv(B, block_b),)

    return pl.pallas_call(
        _make_mlp_kernel(d_in, hidden),
        out_shape=jax.ShapeDtypeStruct((B, 1), x.dtype),
        grid=grid,
        in_specs=[
            pl.BlockSpec((block_b, d_in), lambda i: (i, 0)),       # x tile
            pl.BlockSpec((hidden + 3, width), lambda i: (0, 0)),   # packed params (resident)
        ],
        out_specs=pl.BlockSpec((block_b, 1), lambda i: (i, 0)),
        compiler_params=pltpu.CompilerParams(
            dimension_semantics=("parallel",)),
    )(x, params)


def _torch_linear_init(key, out_features, in_features):
    """Deterministic init mimicking torch.nn.Linear's uniform(-1/sqrt(fan_in), +)."""
    kw, kb = jax.random.split(key)
    bound = 1.0 / jnp.sqrt(jnp.float32(in_features))
    w = jax.random.uniform(kw, (out_features, in_features), jnp.float32,
                           minval=-bound, maxval=bound)
    b = jax.random.uniform(kb, (out_features,), jnp.float32,
                           minval=-bound, maxval=bound)
    return w, b


if __name__ == "__main__":
    input_size = 32
    hidden_size = 64
    batch = 8

    key = jax.random.PRNGKey(0)
    kx, k1, k2 = jax.random.split(key, 3)

    x = jax.random.normal(kx, (batch, input_size), jnp.float32)
    w1, b1 = _torch_linear_init(k1, hidden_size, input_size)   # fc1
    w2, b2 = _torch_linear_init(k2, 1, hidden_size)            # fc2

    params = pack_params(w1, b1, w2, b2)                       # one-time packing
    out = net_forward(x, params)
    jax.block_until_ready(out)

    # Pure-JAX reference check (same semantics as the torch forward).
    ref = jnp.maximum(jnp.maximum(x @ w1.T + b1, 0.0) @ w2.T + b2, 0.0)
    assert out.shape == (batch, 1)
    assert jnp.allclose(out, ref, atol=1e-5, rtol=1e-5)

    print("KERNEL_OK")
</pallas_src>

<mosaic_0001>
module attributes {stable_mosaic.version = 11 : i64} {
  func.func @kernel(%arg0: i32, %arg1: memref<8x32xf32, #tpu.memory_space<vmem>>, %arg2: memref<67x64xf32, #tpu.memory_space<vmem>>, %arg3: memref<8x1xf32, #tpu.memory_space<vmem>>) attributes {dimension_semantics = [#tpu.dimension_semantics<parallel>], iteration_bounds = array<i64: 1>, scalar_prefetch = 0 : i64, scratch_operands = 0 : i64, tpu.core_type = #tpu.core_type<tc>, window_params = [{transform_indices = @transform_0, window_bounds = array<i64: 8, 32>}, {pipeline_mode = #tpu.pipeline_mode<synchronous>, transform_indices = @transform_1, window_bounds = array<i64: 67, 64>}, {transform_indices = @transform_2, window_bounds = array<i64: 8, 1>}]} {
    %c0 = arith.constant 0 : index
    %c0_0 = arith.constant 0 : index
    %0 = vector.load %arg2[%c0, %c0_0] : memref<67x64xf32, #tpu.memory_space<vmem>>, vector<64x32xf32>
    %c64 = arith.constant 64 : index
    %c0_1 = arith.constant 0 : index
    %1 = vector.load %arg2[%c64, %c0_1] : memref<67x64xf32, #tpu.memory_space<vmem>>, vector<1x64xf32>
    %c65 = arith.constant 65 : index
    %c0_2 = arith.constant 0 : index
    %2 = vector.load %arg2[%c65, %c0_2] : memref<67x64xf32, #tpu.memory_space<vmem>>, vector<1x64xf32>
    %c66 = arith.constant 66 : index
    %c0_3 = arith.constant 0 : index
    %3 = vector.load %arg2[%c66, %c0_3] : memref<67x64xf32, #tpu.memory_space<vmem>>, vector<1x1xf32>
    %c0_4 = arith.constant 0 : index
    %c0_5 = arith.constant 0 : index
    %4 = vector.load %arg1[%c0_4, %c0_5] : memref<8x32xf32, #tpu.memory_space<vmem>>, vector<8x32xf32>
    %cst = arith.constant dense<0.000000e+00> : vector<8x64xf32>
    %5 = tpu.matmul %4, %0, %cst {dimension_numbers = #tpu.dot_dimension_numbers<[1], [1], [0], [0], [0, 0, 1, 0], [], []>} : vector<8x32xf32>, vector<64x32xf32>, vector<8x64xf32> -> vector<8x64xf32>
    %6 = vector.broadcast %1 : vector<1x64xf32> to vector<8x64xf32>
    %7 = arith.addf %5, %6 : vector<8x64xf32>
    %cst_6 = arith.constant 0.000000e+00 : f32
    %8 = vector.broadcast %cst_6 : f32 to vector<8x64xf32>
    %9 = arith.maximumf %7, %8 : vector<8x64xf32>
    %10 = vector.broadcast %2 : vector<1x64xf32> to vector<8x64xf32>
    %11 = arith.mulf %9, %10 : vector<8x64xf32>
    %cst_7 = arith.constant dense<0.000000e+00> : vector<8xf32>
    %12 = vector.multi_reduction <add>, %11, %cst_7 [1] : vector<8x64xf32> to vector<8xf32>
    %13 = vector.shape_cast %12 : vector<8xf32> to vector<8x1xf32>
    %14 = vector.broadcast %3 : vector<1x1xf32> to vector<8x1xf32>
    %15 = arith.addf %13, %14 : vector<8x1xf32>
    %cst_8 = arith.constant 0.000000e+00 : f32
    %16 = vector.broadcast %cst_8 : f32 to vector<8x1xf32>
    %17 = arith.maximumf %15, %16 : vector<8x1xf32>
    %c0_9 = arith.constant 0 : index
    %c0_10 = arith.constant 0 : index
    %18 = vector.load %arg3[%c0_9, %c0_10] : memref<8x1xf32, #tpu.memory_space<vmem>>, vector<8x1xf32>
    tpu.vector_store %arg3[%c0_9, %c0_10], %17 {strides = array<i32>} : memref<8x1xf32, #tpu.memory_space<vmem>>, vector<8x1xf32>,
    return
  }
  func.func @transform_0(%arg0: i32) -> (i32, i32) {
    %c0_i32 = arith.constant 0 : i32
    %c0_i32_0 = arith.constant 0 : i32
    return %arg0, %c0_i32 : i32, i32
  }
  func.func @transform_1(%arg0: i32) -> (i32, i32) {
    %c0_i32 = arith.constant 0 : i32
    %c0_i32_0 = arith.constant 0 : i32
    %c0_i32_1 = arith.constant 0 : i32
    return %c0_i32, %c0_i32_0 : i32, i32
  }
  func.func @transform_2(%arg0: i32) -> (i32, i32) {
    %c0_i32 = arith.constant 0 : i32
    %c0_i32_0 = arith.constant 0 : i32
    return %arg0, %c0_i32 : i32, i32
  }
}

</mosaic_0001>

<llo_original>
// kernel: tpu_custom_call.1
$region0: #{tpu_custom_call.1}
  #allocation0 [shape = 'u32[]', space=smem, size = 0x4, offset = 0x4, fixed_abs, tag = 'smem constant byte address 0x4 - core index']
  #allocation1 [shape = 'u32[144,128]{1,0:T(1,128)}', space=vmem, size = 0x12000, scoped, tag = 'internal scratch']
  %s0 = inlined_call_operand.vmem [shape: f32[8,32], index: 0, kind: input, shape index: {}]
  %s1 = inlined_call_operand.vmem [shape: f32[67,64], index: 1, kind: input, shape index: {}]
  %s2 = inlined_call_operand.vmem [shape: f32[8,1], index: 2, kind: output, shape index: {}]
  %s3 = sld [smem:[#allocation0]]
  $region18: #{tpu_custom_call.1} parent=0
    _
  %s5 = ssub.s32 1, %s3
  %s6 = scalar_select 0, %s5, %s3
  // Predicated region
  $region2: #{tpu_custom_call.1} parent=0 // pred_check
    _
  $region3: #{tpu_custom_call.1} parent=0 // pred_check_branch
    %8 = sbr.rel (0) target = $region5
  $region4: #{tpu_custom_call.1} parent=0 // pred_region
    _
  $region5: #{tpu_custom_call.1} parent=0 // pred_fallthru
    _
  // Predicated region
  $region6: #{tpu_custom_call.1} parent=0 // pred_check
    _
  $region7: #{tpu_custom_call.1} parent=0 // pred_check_branch
    %10 = sbr.rel (0) target = $region9
  $region8: #{tpu_custom_call.1} parent=0 // pred_region
    _
  $region9: #{tpu_custom_call.1} parent=0 // pred_fallthru
    _
  %v11 = vld [vmem:[%s1] sm:$0xff]
  %v12 = vld [vmem:[%s1 + $0x8] sm:$0xff]
  %v13 = vld [vmem:[%s1 + $0x10] sm:$0xff]
  %v14 = vld [vmem:[%s1 + $0x18] sm:$0xff]
  %v15 = vld [vmem:[%s1 + $0x20] sm:$0xff]
  %v16 = vld [vmem:[%s1 + $0x28] sm:$0xff]
  %v17 = vld [vmem:[%s1 + $0x30] sm:$0xff]
  %v18 = vld [vmem:[%s1 + $0x38] sm:$0xff]
  %v19 = vld [vmem:[%s1 + $0x40] sm:$0x1]
  %v20 = vld [vmem:[%s1 + $0x41] sm:$0x1]
  %v21 = vld [vmem:[%s1 + $0x42] sm:$0x1]
  %v22 = vld [vmem:[%s0] sm:$0xff]
  %v23 = vlaneseq
  %v24 = vshrl.u32 %v23, 7
  %v25 = vsub.s32 0, %v24
  %v26 = vrot.slane %v19, %v25
  %vm27 = vcmask 261120
  %v29 = vsel %vm27, %v22, 0
  %v32 = vsel %vm27, %v11, 0
  %v35 = vsel %vm27, %v12, 0
  %v38 = vsel %vm27, %v13, 0
  %v41 = vsel %vm27, %v14, 0
  %v44 = vsel %vm27, %v15, 0
  %v47 = vsel %vm27, %v16, 0
  %v50 = vsel %vm27, %v17, 0
  %v53 = vsel %vm27, %v18, 0
  %55 = vmatprep.subr.mxu0 0.0
  %56 = vmatpush1.xpose.msra.mxu0 %v32
  %57 = vmatprep.subr.mxu0 0.0
  %58 = vmatpush1.xpose.msra.mxu0 %v35
  %59 = vmatprep.subr.mxu0 0.0
  %60 = vmatpush1.xpose.msra.mxu0 %v38
  %61 = vmatprep.subr.mxu0 0.0
  %62 = vmatpush1.xpose.msra.mxu0 %v41
  %63 = vmatprep.subr.mxu0 0.0
  %64 = vmatpush1.xpose.msra.mxu0 %v44
  %65 = vmatprep.subr.mxu0 0.0
  %66 = vmatpush1.xpose.msra.mxu0 %v47
  %67 = vmatprep.subr.mxu0 0.0
  %68 = vmatpush1.xpose.msra.mxu0 %v50
  %69 = vmatprep.subr.mxu0 0.0
  %70 = vmatpush1.xpose.msra.mxu0 %v53
  %71 = vmatprep.subr.mxu0 0.0
  %72 = vmatpush1.xpose.msra.mxu0 0.0
  %73 = vmatprep.subr.mxu0 0.0
  %74 = vmatpush1.xpose.msra.mxu0 0.0
  %75 = vmatprep.subr.mxu0 0.0
  %76 = vmatpush1.xpose.msra.mxu0 0.0
  %77 = vmatprep.subr.mxu0 0.0
  %78 = vmatpush1.xpose.msra.mxu0 0.0
  %79 = vmatprep.subr.mxu0 0.0
  %80 = vmatpush1.xpose.msra.mxu0 0.0
  %81 = vmatprep.subr.mxu0 0.0
  %82 = vmatpush1.xpose.msra.mxu0 0.0
  %83 = vmatprep.subr.mxu0 0.0
  %84 = vmatpush1.xpose.msra.mxu0 0.0
  %85 = vmatprep.subr.mxu0 0.0
  %86 = vmatpush1.xpose.msra.mxu0 0.0
  %87 = vmatprep.subr.mxu0 0.0
  %88 = vmatpush1.xpose.msra.mxu0 0.0
  %89 = vmatprep.subr.mxu0 0.0
  %90 = vmatpush1.xpose.msra.mxu0 0.0
  %91 = vmatprep.subr.mxu0 0.0
  %92 = vmatpush1.xpose.msra.mxu0 0.0
  %93 = vmatprep.subr.mxu0 0.0
  %94 = vmatpush1.xpose.msra.mxu0 0.0
  %95 = vmatprep.subr.mxu0 0.0
  %96 = vmatpush1.xpose.msra.mxu0 0.0
  %97 = vmatprep.subr.mxu0 0.0
  %98 = vmatpush1.xpose.msra.mxu0 0.0
  %99 = vmatprep.subr.mxu0 0.0
  %100 = vmatpush1.xpose.msra.mxu0 0.0
  %101 = vmatprep.subr.mxu0 0.0
  %102 = vmatpush1.xpose.msra.mxu0 0.0
  %103 = vmatprep.subr.mxu0 0.0
  %104 = vmatpush1.xpose.msra.mxu0 0.0
  %105 = vmatprep.subr.mxu0 0.0
  %106 = vmatpush1.xpose.msra.mxu0 0.0
  %107 = vmatprep.subr.mxu0 0.0
  %108 = vmatpush1.xpose.msra.mxu0 0.0
  %109 = vmatprep.subr.mxu0 0.0
  %110 = vmatpush1.xpose.msra.mxu0 0.0
  %111 = vmatprep.subr.mxu0 0.0
  %112 = vmatpush1.xpose.msra.mxu0 0.0
  %113 = vmatprep.subr.mxu0 0.0
  %114 = vmatpush1.xpose.msra.mxu0 0.0
  %115 = vmatprep.subr.mxu0 0.0
  %116 = vmatpush1.xpose.msra.mxu0 0.0
  %117 = vmatprep.subr.mxu0 0.0
  %118 = vmatpush1.xpose.msra.mxu0 0.0
  %119 = vmatprep.mubr.f32.mxu0 0.0
  %120 = vmatmul.mubr.f32.gmra.mrb[0].mxu0 %v29
  %v121 = vpop.f32.mrb[0].mxu0
  %v122 = vadd.f32 %v26, %v121
  %v123 = vpop.f32.mrb[0].mxu0
  %124 = vdwg.mxu0
  %v125 = vmax.f32 %v122, 0.0
  %v126 = vlaneseq
  %v127 = vshrl.u32 %v126, 7
  %v128 = vsub.s32 0, %v127
  %v129 = vrot.slane %v20, %v128
  %v130 = vmul.f32 %v125, %v129
  %vm131 = vcmask 523264
  %v132 = vsel %vm131, %v130, 0.0
  %133 = vadd.xlane.f32.xlu0 %v132
  %v134 = vpop.xlane.xlu0 %133
  %v135 = vlaneseq
  %v136 = vshrl.u32 %v135, 7
  %v137 = vsub.s32 0, %v136
  %v138 = vrot.slane %v21, %v137
  %v139 = vadd.f32 %v134, %v138
  %v140 = vmax.f32 %v139, 0.0
  %vm141 = vcmask 7168
  %142 = vst.msk [vmem:[%s2] sm:$0xff] %vm141, %v140
  // Predicated region
  $region10: #{tpu_custom_call.1} parent=0 // pred_check
    _
  $region11: #{tpu_custom_call.1} parent=0 // pred_check_branch
    %144 = sbr.rel (0) target = $region13
  $region12: #{tpu_custom_call.1} parent=0 // pred_region
    _
  $region13: #{tpu_custom_call.1} parent=0 // pred_fallthru
    _
  // Predicated region
  $region14: #{tpu_custom_call.1} parent=0 // pred_check
    _
  $region15: #{tpu_custom_call.1} parent=0 // pred_check_branch
    %146 = sbr.rel (0) target = $region17
  $region16: #{tpu_custom_call.1} parent=0 // pred_region
    _
  $region17: #{tpu_custom_call.1} parent=0 // pred_fallthru
    _

</llo_original>
